<compile_context>
chip_gen: v6e
topology: v6e:2x2x1
jax: 0.10.0
libtpu: 0.0.40
codegen_flags: <defaults>
</compile_context>

<pallas_src>
import functools

import jax
import jax.numpy as jnp
from jax.experimental import pallas as pl
from jax.experimental.pallas import tpu as pltpu

EPS = 1e-5                      # nn.BatchNorm2d default eps
LANE = 128                      # pad channel dims to multiples of the lane width
DEFAULT_TM = 256                # row tile (multiple of 8); small enough that double-
                                # buffered tiles fit comfortably in v7x's 64 MiB VMEM
VMEM_LIMIT = 32 * 1024 * 1024   # explicit scoped-VMEM budget with headroom on all gens


def _rup(x, m):
    return (x + m - 1) // m * m


def _pad_to(a, shape):
    return jnp.pad(a, [(0, s - d) for d, s in zip(a.shape, shape)])


# ---------------------------------------------------------------------------
# Pallas kernels
# ---------------------------------------------------------------------------
def _matmul_stats_kernel(x_ref, w_ref, y_ref, s_ref, ss_ref):
    """One M-tile: y = x @ w (MXU, f32 accumulate) + per-tile column sum / sumsq."""
    y = jnp.dot(x_ref[...], w_ref[...], preferred_element_type=jnp.float32)
    y_ref[...] = y.astype(y_ref.dtype)
    col_sum = jnp.sum(y, axis=0, keepdims=True)            # (1, C)
    col_ssq = jnp.sum(y * y, axis=0, keepdims=True)        # (1, C)  E[y^2] partial
    s_ref[...] = jnp.broadcast_to(col_sum[None], s_ref.shape)
    ss_ref[...] = jnp.broadcast_to(col_ssq[None], ss_ref.shape)


def _conv3x3_stats_kernel(xph_ref, w_ref, y_ref, s_ref, ss_ref, *, stride, Ho, Wo):
    """3x3 conv for one image as 9 shifted matmuls over phase-decomposed input.

    xph_ref: (stride^2, 1, Hn, Wn, C)   phase (p, q) holds rows/cols congruent to
                                        (p, q) mod stride of the zero-padded image.
    w_ref:   (9, C, Cout)               tap kh*3+kw, laid out (cin, cout).
    """
    cin = xph_ref.shape[-1]
    cout = w_ref.shape[2]
    acc = jnp.zeros((Ho * Wo, cout), jnp.float32)
    for kh in range(3):
        for kw in range(3):
            ph = (kh % stride) * stride + (kw % stride)
            dh, dw = kh // stride, kw // stride
            # Leading-axis slice of the ref (always tile-aligned), then a static f32
            # shift along W and a layout-preserving flatten to (Ho*Wo, C).
            slab = xph_ref[ph, 0, dh:dh + Ho, :, :].astype(jnp.float32)
            tap = slab[:, dw:dw + Wo, :].reshape(Ho * Wo, cin)
            acc = acc + jnp.dot(tap.astype(w_ref.dtype), w_ref[kh * 3 + kw],
                                preferred_element_type=jnp.float32)
    y_ref[...] = acc[None].astype(y_ref.dtype)
    col_sum = jnp.sum(acc, axis=0, keepdims=True)
    col_ssq = jnp.sum(acc * acc, axis=0, keepdims=True)
    s_ref[...] = jnp.broadcast_to(col_sum[None], s_ref.shape)
    ss_ref[...] = jnp.broadcast_to(col_ssq[None], ss_ref.shape)


def _bn_apply_kernel(y_ref, scale_ref, shift_ref, *rest, add_residual, apply_relu):
    """y * scale + shift (+ residual) (+ ReLU), tiled over M."""
    o_ref = rest[-1]
    out = y_ref[...].astype(jnp.float32) * scale_ref[...] + shift_ref[...]
    if add_residual:
        out = out + rest[0][...].astype(jnp.float32)
    if apply_relu:
        out = jnp.maximum(out, 0.0)
    o_ref[...] = out.astype(o_ref.dtype)


# ---------------------------------------------------------------------------
# Wrappers: fused conv(+BN(+residual)(+ReLU)) building blocks
# ---------------------------------------------------------------------------
def _finalize_bn(ssum, ssq, gamma, beta, m_true, eps):
    """Reduce per-tile partials (tiny arrays) into BN scale/shift."""
    total = ssum[:, 0, :].sum(axis=0)
    total_sq = ssq[:, 0, :].sum(axis=0)
    mean = total / m_true
    var = jnp.maximum(total_sq / m_true - mean * mean, 0.0)   # biased var, f32
    scale = gamma * jax.lax.rsqrt(var + eps)
    shift = beta - mean * scale
    return scale.astype(jnp.float32), shift.astype(jnp.float32)


def _bn_apply(y, scale, shift, residual, *, m_true, apply_relu, out_dtype, tm):
    cp = y.shape[1]
    tm_eff = min(tm, _rup(m_true, 8))
    mp = _rup(m_true, tm_eff)
    if y.shape[0] < mp:
        y = _pad_to(y, (mp, cp))
    elif y.shape[0] > mp:
        y = y[:mp]

    inputs = [y, scale.reshape(1, cp), shift.reshape(1, cp)]
    in_specs = [pl.BlockSpec((tm_eff, cp), lambda i: (i, 0)),
                pl.BlockSpec((1, cp), lambda i: (0, 0)),
                pl.BlockSpec((1, cp), lambda i: (0, 0))]
    add_res = residual is not None
    if add_res:
        res = residual
        if res.shape[0] < mp:
            res = _pad_to(res, (mp, cp))
        inputs.append(res)
        in_specs.append(pl.BlockSpec((tm_eff, cp), lambda i: (i, 0)))

    kernel = functools.partial(_bn_apply_kernel, add_residual=add_res,
                               apply_relu=apply_relu)
    out = pl.pallas_call(
        kernel,
        grid=(mp // tm_eff,),
        in_specs=in_specs,
        out_specs=pl.BlockSpec((tm_eff, cp), lambda i: (i, 0)),
        out_shape=jax.ShapeDtypeStruct((mp, cp), out_dtype),
        compiler_params=pltpu.CompilerParams(
            dimension_semantics=("parallel",), vmem_limit_bytes=VMEM_LIMIT),
    )(*inputs)
    return out[:m_true]


def fused_conv1x1_bn(x, w, gamma, beta, residual=None, *, apply_relu,
                     compute_dtype=jnp.float32, out_dtype=None,
                     tm=DEFAULT_TM, eps=EPS):
    """x: (M, Kp), w: (Kp, Cp), gamma/beta: (Cp,) -> (M, Cp) in out_dtype."""
    m_true, kp = x.shape
    cp = w.shape[1]
    out_dtype = out_dtype or compute_dtype
    tm_eff = min(tm, _rup(m_true, 8))
    mp = _rup(m_true, tm_eff)
    g = mp // tm_eff

    xpad = _pad_to(x, (mp, kp)).astype(compute_dtype)   # zero rows: inert for stats
    wc = w.astype(compute_dtype)                        # cast once; stays VMEM-resident

    bpe = jnp.dtype(compute_dtype).itemsize
    cost = pl.CostEstimate(flops=2 * mp * kp * cp, transcendentals=0,
                           bytes_accessed=(mp * kp + kp * cp + mp * cp) * bpe)

    y, ssum, ssq = pl.pallas_call(
        _matmul_stats_kernel,
        grid=(g,),
        in_specs=[pl.BlockSpec((tm_eff, kp), lambda i: (i, 0)),
                  pl.BlockSpec((kp, cp), lambda i: (0, 0))],
        out_specs=[pl.BlockSpec((tm_eff, cp), lambda i: (i, 0)),
                   pl.BlockSpec((1, 8, cp), lambda i: (i, 0, 0)),
                   pl.BlockSpec((1, 8, cp), lambda i: (i, 0, 0))],
        out_shape=[jax.ShapeDtypeStruct((mp, cp), compute_dtype),
                   jax.ShapeDtypeStruct((g, 8, cp), jnp.float32),
                   jax.ShapeDtypeStruct((g, 8, cp), jnp.float32)],
        compiler_params=pltpu.CompilerParams(
            dimension_semantics=("parallel",), vmem_limit_bytes=VMEM_LIMIT),
        cost_estimate=cost,
    )(xpad, wc)

    scale, shift = _finalize_bn(ssum, ssq, gamma, beta, m_true, eps)
    return _bn_apply(y, scale, shift, residual, m_true=m_true,
                     apply_relu=apply_relu, out_dtype=out_dtype, tm=tm)


def fused_conv3x3_bn(x_nhwc, w_taps, gamma, beta, stride, *, apply_relu,
                     compute_dtype=jnp.float32, out_dtype=None,
                     tm=DEFAULT_TM, eps=EPS):
    """3x3 / pad=1 / stride conv + BN(+ReLU).  x_nhwc: (N, H, W, Cp); w_taps: (9, Cp, Cop).

    Returns ((N*Ho*Wo, Cop), (Ho, Wo)).
    """
    n, h, w, cp = x_nhwc.shape
    cop = w_taps.shape[2]
    out_dtype = out_dtype or compute_dtype
    s = stride
    ho = (h - 1) // s + 1
    wo = (w - 1) // s + 1
    hn = ho + 2 // s
    wn = wo + 2 // s

    # Zero-pad (1 for the conv's padding=1, plus slack so every phase has >= hn/wn
    # extent) and split into stride^2 spatial phases. Tap (kh, kw) then reads phase
    # (kh % s, kw % s) at a *contiguous* static offset, so the kernel never needs a
    # strided load and im2col patches never hit HBM.
    xp = jnp.pad(x_nhwc, ((0, 0), (1, 1 + s), (1, 1 + s), (0, 0)))
    phases = [xp[:, p::s, q::s, :][:, :hn, :wn, :] for p in range(s) for q in range(s)]
    xph = jnp.stack(phases, axis=0).astype(compute_dtype)   # (s*s, N, hn, wn, cp)
    wc = w_taps.astype(compute_dtype)

    bpe = jnp.dtype(compute_dtype).itemsize
    cost = pl.CostEstimate(flops=2 * n * ho * wo * 9 * cp * cop, transcendentals=0,
                           bytes_accessed=(xph.size + wc.size + n * ho * wo * cop) * bpe)

    kernel = functools.partial(_conv3x3_stats_kernel, stride=s, Ho=ho, Wo=wo)
    y, ssum, ssq = pl.pallas_call(
        kernel,
        grid=(n,),
        in_specs=[pl.BlockSpec((s * s, 1, hn, wn, cp), lambda b: (0, b, 0, 0, 0)),
                  pl.BlockSpec((9, cp, cop), lambda b: (0, 0, 0))],
        out_specs=[pl.BlockSpec((1, ho * wo, cop), lambda b: (b, 0, 0)),
                   pl.BlockSpec((1, 8, cop), lambda b: (b, 0, 0)),
                   pl.BlockSpec((1, 8, cop), lambda b: (b, 0, 0))],
        out_shape=[jax.ShapeDtypeStruct((n, ho * wo, cop), compute_dtype),
                   jax.ShapeDtypeStruct((n, 8, cop), jnp.float32),
                   jax.ShapeDtypeStruct((n, 8, cop), jnp.float32)],
        compiler_params=pltpu.CompilerParams(
            dimension_semantics=("parallel",), vmem_limit_bytes=VMEM_LIMIT),
        cost_estimate=cost,
    )(xph, wc)

    m_true = n * ho * wo
    scale, shift = _finalize_bn(ssum, ssq, gamma, beta, m_true, eps)
    out = _bn_apply(y.reshape(m_true, cop), scale, shift, None, m_true=m_true,
                    apply_relu=apply_relu, out_dtype=out_dtype, tm=tm)
    return out, (ho, wo)


# ---------------------------------------------------------------------------
# Bottleneck forward
# ---------------------------------------------------------------------------
def bottleneck_forward(x_nchw, p, stride, *, compute_dtype=jnp.float32, tm=DEFAULT_TM):
    n, cin, h, w = x_nchw.shape
    planes = p['w1'].shape[0]
    cout = 4 * planes

    cin_p = _rup(cin, LANE)
    pl_p = _rup(planes, LANE)
    cout_p = _rup(cout, LANE)

    # NCHW -> NHWC (lane-dense channels-last layout for every kernel).
    x = jnp.transpose(x_nchw, (0, 2, 3, 1))

    # Zero-padded, lane-aligned weights / BN params (padding is inert: padded input
    # channels are zero, padded output channels are discarded at the end).
    w1 = _pad_to(p['w1'][:, :, 0, 0].T, (cin_p, pl_p))
    w3 = _pad_to(p['w3'][:, :, 0, 0].T, (pl_p, cout_p))
    w2 = _pad_to(p['w2'].transpose(2, 3, 1, 0).reshape(9, planes, planes),
                 (9, pl_p, pl_p))                     # tap kh*3+kw, layout (cin, cout)
    g1, b1 = _pad_to(p['g1'], (pl_p,)), _pad_to(p['b1'], (pl_p,))
    g2, b2 = _pad_to(p['g2'], (pl_p,)), _pad_to(p['b2'], (pl_p,))
    g3, b3 = _pad_to(p['g3'], (cout_p,)), _pad_to(p['b3'], (cout_p,))

    # conv1 (1x1) + bn1 + relu
    x_flat = _pad_to(x.reshape(n * h * w, cin), (n * h * w, cin_p))
    y1 = fused_conv1x1_bn(x_flat, w1, g1, b1, apply_relu=True,
                          compute_dtype=compute_dtype, tm=tm)
    y1 = y1.reshape(n, h, w, pl_p)

    # conv2 (3x3, stride, pad=1) + bn2 + relu — in-kernel shifted matmuls, no im2col
    y2, (ho, wo) = fused_conv3x3_bn(y1, w2, g2, b2, stride, apply_relu=True,
                                    compute_dtype=compute_dtype, tm=tm)

    # shortcut: strided 1x1 conv + bn when the shape changes, else identity
    if stride != 1 or cin != cout:
        wsc = _pad_to(p['wsc'][:, :, 0, 0].T, (cin_p, cout_p))
        gsc, bsc = _pad_to(p['gsc'], (cout_p,)), _pad_to(p['bsc'], (cout_p,))
        # TODO(synk): fold the strided spatial subsample into the kernel's index_map
        # instead of this wrapper-level gather (it only touches 1/stride^2 of x).
        xs = x[:, ::stride, ::stride, :].reshape(n * ho * wo, cin)
        xs = _pad_to(xs, (n * ho * wo, cin_p))
        sc = fused_conv1x1_bn(xs, wsc, gsc, bsc, apply_relu=False,
                              compute_dtype=compute_dtype, tm=tm)
    else:
        sc = x_flat       # identity path: cin == cout, so cin_p == cout_p

    # conv3 (1x1) + bn3 + residual add + relu — residual/ReLU fused in the BN pass
    y3 = fused_conv1x1_bn(y2, w3, g3, b3, residual=sc, apply_relu=True,
                          compute_dtype=compute_dtype, out_dtype=jnp.float32, tm=tm)

    out = y3[:, :cout].reshape(n, ho, wo, cout)
    # TODO(synk): keep NHWC and fuse this transpose into the consumer's BlockSpec.
    return jnp.transpose(out, (0, 3, 1, 2))


# ---------------------------------------------------------------------------
# Pure-JAX reference (mirrors the PyTorch forward) for correctness checking
# ---------------------------------------------------------------------------
def _bn_ref(y, gamma, beta, eps=EPS):
    mean = y.mean(axis=(0, 2, 3), keepdims=True)
    var = ((y - mean) ** 2).mean(axis=(0, 2, 3), keepdims=True)
    yhat = (y - mean) / jnp.sqrt(var + eps)
    return yhat * gamma[None, :, None, None] + beta[None, :, None, None]


def bottleneck_ref(x, p, stride):
    conv = lambda a, w, s, pd: jax.lax.conv_general_dilated(
        a, w, (s, s), [(pd, pd), (pd, pd)],
        dimension_numbers=('NCHW', 'OIHW', 'NCHW'))
    out = jax.nn.relu(_bn_ref(conv(x, p['w1'], 1, 0), p['g1'], p['b1']))
    out = jax.nn.relu(_bn_ref(conv(out, p['w2'], stride, 1), p['g2'], p['b2']))
    out = _bn_ref(conv(out, p['w3'], 1, 0), p['g3'], p['b3'])
    cin, cout = x.shape[1], p['w3'].shape[0]
    if stride != 1 or cin != cout:
        sc = _bn_ref(conv(x, p['wsc'], stride, 0), p['gsc'], p['bsc'])
    else:
        sc = x
    return jax.nn.relu(out + sc)


if __name__ == "__main__":
    in_planes, planes, stride = 4, 4, 2
    expansion = 4
    N, H, W = 2, 16, 16

    ks = jax.random.split(jax.random.PRNGKey(0), 13)
    p = {
        'w1': 0.1 * jax.random.normal(ks[0], (planes, in_planes, 1, 1), jnp.float32),
        'g1': 1.0 + 0.1 * jax.random.normal(ks[1], (planes,), jnp.float32),
        'b1': 0.1 * jax.random.normal(ks[2], (planes,), jnp.float32),
        'w2': 0.1 * jax.random.normal(ks[3], (planes, planes, 3, 3), jnp.float32),
        'g2': 1.0 + 0.1 * jax.random.normal(ks[4], (planes,), jnp.float32),
        'b2': 0.1 * jax.random.normal(ks[5], (planes,), jnp.float32),
        'w3': 0.1 * jax.random.normal(ks[6], (expansion * planes, planes, 1, 1), jnp.float32),
        'g3': 1.0 + 0.1 * jax.random.normal(ks[7], (expansion * planes,), jnp.float32),
        'b3': 0.1 * jax.random.normal(ks[8], (expansion * planes,), jnp.float32),
        'wsc': 0.1 * jax.random.normal(ks[9], (expansion * planes, in_planes, 1, 1), jnp.float32),
        'gsc': 1.0 + 0.1 * jax.random.normal(ks[10], (expansion * planes,), jnp.float32),
        'bsc': 0.1 * jax.random.normal(ks[11], (expansion * planes,), jnp.float32),
    }
    x = jax.random.normal(ks[12], (N, in_planes, H, W), jnp.float32)

    # f32 path (v5e-safe default): tight check against the pure-JAX reference.
    out = jax.block_until_ready(bottleneck_forward(x, p, stride))
    ref = jax.block_until_ready(bottleneck_ref(x, p, stride))
    assert out.shape == (N, expansion * planes, H // stride, W // stride), out.shape
    assert jnp.allclose(out, ref, atol=1e-4, rtol=1e-4), \
        float(jnp.max(jnp.abs(out - ref)))

    # bf16 MXU path (recommended on v6e/v7x): same kernels, f32 accumulation/BN math.
    out_bf16 = jax.block_until_ready(
        bottleneck_forward(x, p, stride, compute_dtype=jnp.bfloat16))
    assert float(jnp.max(jnp.abs(out_bf16 - ref))) < 0.25

    print("KERNEL_OK")
</pallas_src>

<mosaic_0001>
module attributes {stable_mosaic.version = 11 : i64} {
  func.func @_matmul_stats_kernel(%arg0: i32, %arg1: memref<256x128xf32, #tpu.memory_space<vmem>>, %arg2: memref<128x128xf32, #tpu.memory_space<vmem>>, %arg3: memref<256x128xf32, #tpu.memory_space<vmem>>, %arg4: memref<1x8x128xf32, #tpu.memory_space<vmem>>, %arg5: memref<1x8x128xf32, #tpu.memory_space<vmem>>) attributes {dimension_semantics = [#tpu.dimension_semantics<parallel>], iteration_bounds = array<i64: 2>, scalar_prefetch = 0 : i64, scratch_operands = 0 : i64, tpu.core_type = #tpu.core_type<tc>, window_params = [{transform_indices = @transform_0, window_bounds = array<i64: 256, 128>}, {pipeline_mode = #tpu.pipeline_mode<synchronous>, transform_indices = @transform_1, window_bounds = array<i64: 128, 128>}, {transform_indices = @transform_2, window_bounds = array<i64: 256, 128>}, {transform_indices = @transform_3, window_bounds = array<i64: 1, 8, 128>}, {transform_indices = @transform_4, window_bounds = array<i64: 1, 8, 128>}]} {
    %c0 = arith.constant 0 : index
    %c0_0 = arith.constant 0 : index
    %0 = vector.load %arg1[%c0, %c0_0] : memref<256x128xf32, #tpu.memory_space<vmem>>, vector<256x128xf32>
    %c0_1 = arith.constant 0 : index
    %c0_2 = arith.constant 0 : index
    %1 = vector.load %arg2[%c0_1, %c0_2] : memref<128x128xf32, #tpu.memory_space<vmem>>, vector<128x128xf32>
    %cst = arith.constant dense<0.000000e+00> : vector<256x128xf32>
    %2 = tpu.matmul %0, %1, %cst {dimension_numbers = #tpu.dot_dimension_numbers<[1], [0], [0], [1], [0, 0, 1, 1], [], []>} : vector<256x128xf32>, vector<128x128xf32>, vector<256x128xf32> -> vector<256x128xf32>
    %c0_3 = arith.constant 0 : index
    %c0_4 = arith.constant 0 : index
    %3 = vector.load %arg3[%c0_3, %c0_4] : memref<256x128xf32, #tpu.memory_space<vmem>>, vector<256x128xf32>
    tpu.vector_store %arg3[%c0_3, %c0_4], %2 {strides = array<i32>} : memref<256x128xf32, #tpu.memory_space<vmem>>, vector<256x128xf32>,
    %cst_5 = arith.constant dense<0.000000e+00> : vector<128xf32>
    %4 = vector.multi_reduction <add>, %2, %cst_5 [0] : vector<256x128xf32> to vector<128xf32>
    %5 = vector.shape_cast %4 : vector<128xf32> to vector<1x128xf32>
    %6 = arith.mulf %2, %2 : vector<256x128xf32>
    %cst_6 = arith.constant dense<0.000000e+00> : vector<128xf32>
    %7 = vector.multi_reduction <add>, %6, %cst_6 [0] : vector<256x128xf32> to vector<128xf32>
    %8 = vector.shape_cast %7 : vector<128xf32> to vector<1x128xf32>
    %9 = vector.shape_cast %5 : vector<1x128xf32> to vector<1x1x128xf32>
    %10 = vector.shape_cast %9 : vector<1x1x128xf32> to vector<1x1x128xf32>
    %11 = vector.broadcast %10 : vector<1x1x128xf32> to vector<1x8x128xf32>
    %c0_7 = arith.constant 0 : index
    %c0_8 = arith.constant 0 : index
    %c0_9 = arith.constant 0 : index
    %12 = vector.load %arg4[%c0_7, %c0_8, %c0_9] : memref<1x8x128xf32, #tpu.memory_space<vmem>>, vector<1x8x128xf32>
    tpu.vector_store %arg4[%c0_7, %c0_8, %c0_9], %11 {strides = array<i32>} : memref<1x8x128xf32, #tpu.memory_space<vmem>>, vector<1x8x128xf32>,
    %13 = vector.shape_cast %8 : vector<1x128xf32> to vector<1x1x128xf32>
    %14 = vector.shape_cast %13 : vector<1x1x128xf32> to vector<1x1x128xf32>
    %15 = vector.broadcast %14 : vector<1x1x128xf32> to vector<1x8x128xf32>
    %c0_10 = arith.constant 0 : index
    %c0_11 = arith.constant 0 : index
    %c0_12 = arith.constant 0 : index
    %16 = vector.load %arg5[%c0_10, %c0_11, %c0_12] : memref<1x8x128xf32, #tpu.memory_space<vmem>>, vector<1x8x128xf32>
    tpu.vector_store %arg5[%c0_10, %c0_11, %c0_12], %15 {strides = array<i32>} : memref<1x8x128xf32, #tpu.memory_space<vmem>>, vector<1x8x128xf32>,
    return
  }
  func.func @transform_0(%arg0: i32) -> (i32, i32) {
    %c0_i32 = arith.constant 0 : i32
    %c0_i32_0 = arith.constant 0 : i32
    return %arg0, %c0_i32 : i32, i32
  }
  func.func @transform_1(%arg0: i32) -> (i32, i32) {
    %c0_i32 = arith.constant 0 : i32
    %c0_i32_0 = arith.constant 0 : i32
    %c0_i32_1 = arith.constant 0 : i32
    return %c0_i32, %c0_i32_0 : i32, i32
  }
  func.func @transform_2(%arg0: i32) -> (i32, i32) {
    %c0_i32 = arith.constant 0 : i32
    %c0_i32_0 = arith.constant 0 : i32
    return %arg0, %c0_i32 : i32, i32
  }
  func.func @transform_3(%arg0: i32) -> (i32, i32, i32) {
    %c0_i32 = arith.constant 0 : i32
    %c0_i32_0 = arith.constant 0 : i32
    %c0_i32_1 = arith.constant 0 : i32
    return %arg0, %c0_i32, %c0_i32_0 : i32, i32, i32
  }
  func.func @transform_4(%arg0: i32) -> (i32, i32, i32) {
    %c0_i32 = arith.constant 0 : i32
    %c0_i32_0 = arith.constant 0 : i32
    %c0_i32_1 = arith.constant 0 : i32
    return %arg0, %c0_i32, %c0_i32_0 : i32, i32, i32
  }
}

</mosaic_0001>

<llo_original>
// kernel: tpu_custom_call.1
$region0: #{tpu_custom_call.1}
  #allocation0 [shape = 'u32[]', space=smem, size = 0x4, offset = 0x4, fixed_abs, tag = 'smem constant byte address 0x4 - core index']
  #allocation1 [shape = 'u32[144,128]{1,0:T(1,128)}', space=vmem, size = 0x12000, scoped, tag = 'internal scratch']
  %s0 = inlined_call_operand.hbm [shape: f32[512,128], index: 0, kind: input, shape index: {}]
  %s1 = inlined_call_operand.hbm [shape: f32[128,128], index: 1, kind: input, shape index: {}]
  %s2 = inlined_call_operand.hbm [shape: f32[512,128], index: 2, kind: output, shape index: {0}]
  %s3 = inlined_call_operand.hbm [shape: f32[2,8,128], index: 3, kind: output, shape index: {1}]
  %s4 = inlined_call_operand.hbm [shape: f32[2,8,128], index: 4, kind: output, shape index: {2}]
  %5 = xla_tuple %s2, %s3, %s4
  %s6 = sld [smem:[#allocation0]]
  $region65: #{tpu_custom_call.1} parent=0
    _
  %s8 = ssub.s32 1, %s6
  %s9 = scalar_select 0, %s8, %s6
  $region1: #{tpu_custom_call.1} parent=0
    #allocation2 [shape = 'u8[262144]{0}', space=vmem, size = 0x40000, scoped, tag = 'input window, operand 0']
    #allocation3 [shape = 's32[2]{0}', space=sflag, size = 0x8, scoped, tag = 'scoped memory for tpu_custom_call.1']
    #allocation4 [shape = 's32[2]{0}', space=sflag, size = 0x8, scoped, tag = 'scoped memory for tpu_custom_call.1']
    #allocation5 [shape = 'u8[65536]{0}', space=vmem, size = 0x10000, scoped, tag = 'input window, operand 1, single buffered']
    #allocation6 [shape = 's32[1]{0}', space=sflag, size = 0x4, scoped, tag = 'scoped memory for tpu_custom_call.1']
    #allocation7 [shape = 'u8[262144]{0}', space=vmem, size = 0x40000, scoped, tag = 'output window, operand 0']
    #allocation8 [shape = 'u8[8192]{0}', space=vmem, size = 0x2000, scoped, tag = 'output window, operand 1']
    #allocation9 [shape = 's32[2]{0}', space=sflag, size = 0x8, scoped, tag = 'scoped memory for tpu_custom_call.1']
    #allocation10 [shape = 'u8[8192]{0}', space=vmem, size = 0x2000, scoped, tag = 'output window, operand 2']
    %10 = vsyncpa [#allocation3], 0
    %s11 = scalar_lea.sflag [#allocation3], 1
    %12 = vsyncpa %s11, 0
    %13 = vsyncpa [#allocation6], 0
    %14 = vsyncpa [#allocation4], 0
    %s15 = scalar_lea.sflag [#allocation4], 1
    %16 = vsyncpa %s15, 0
    %17 = vsyncpa [#allocation9], 0
    %s18 = scalar_lea.sflag [#allocation9], 1
    %19 = vsyncpa %s18, 0
    loop: start=0, step=1, limit=4
    $region2: #{tpu_custom_call.1} parent=1 // loop_pre_header
      _
    $region3: #{tpu_custom_call.1} parent=1 // loop_header
      %s21 = sphi 0, %s25
      %p22 = scmp.ge.s32.totalorder %s21, 4
      %s31 = sphi 0, %s33
      %s34 = sphi 0, %s31
      %s35 = sphi 0, %s34
      %s51 = sphi 0, %s35
      %s55 = sphi 0, %s55
      %s57 = sphi 0, %s55
      %s58 = sphi 0, %s57
      %s72 = sphi 0, %s58
      %s78 = sphi 0, %s80
      %s81 = sphi 0, %s78
      %s82 = sphi 0, %s81
      %s98 = sphi 0, %s82
      %s104 = sphi 0, %s106
      %s107 = sphi 0, %s104
      %s108 = sphi 0, %s107
      %s124 = sphi 0, %s108
      %s130 = sphi 0, %s132
      %s133 = sphi 0, %s130
      %s134 = sphi 0, %s133
      %s150 = sphi 0, %s134
    $region4: #{tpu_custom_call.1} parent=1 // loop_header_branch
      %24 = sbr.rel (%p22) target = $region8
    $region5: #{tpu_custom_call.1} parent=1 // loop_body
      %s26 = ssub.s32 %s21, 1
      %s27 = ssub.s32 %s21, 2
      %s28 = sadd.s32 %s21, 1
      %s29 = ssub.s32 %s21, %s28
      %p30 = scmp.eq.s32.totalorder %s29, 0
      %s32 = sadd.s32 %s31, 1
      %s33 = scalar_select %p30, %s31, %s32
      %p36 = pneg %p30
      %p37 = scmp.eq.s32.totalorder %s21, 1
      %p38 = por %p36, %p37
      %p39 = scmp.ne.s32.totalorder %s31, %s34
      %p40 = scmp.eq.s32.totalorder %s21, 0
      %p41 = por %p39, %p40
      %p42 = scmp.ne.s32.totalorder %s31, %s34
      %p43 = scmp.eq.s32.totalorder %s26, 1
      %p44 = por %p42, %p43
      %p45 = scmp.ne.s32.totalorder %s34, %s35
      %p46 = scmp.eq.s32.totalorder %s26, 0
      %p47 = por %p45, %p46
      %p48 = scmp.ne.s32.totalorder %s34, %s35
      %p49 = scmp.eq.s32.totalorder %s27, 1
      %p50 = por %p48, %p49
      %p52 = scmp.ne.s32.totalorder %s35, %s51
      %p53 = scmp.eq.s32.totalorder %s27, 0
      %p54 = por %p52, %p53
      %s56 = sadd.s32 %s55, 1
      %p59 = scmp.eq.s32.totalorder %s21, 1
      %p60 = scmp.ne.s32.totalorder %s55, %s57
      %p61 = scmp.eq.s32.totalorder %s21, 0
      %p62 = por %p60, %p61
      %p63 = scmp.ne.s32.totalorder %s55, %s57
      %p64 = scmp.eq.s32.totalorder %s26, 1
      %p65 = por %p63, %p64
      %p66 = scmp.ne.s32.totalorder %s57, %s58
      %p67 = scmp.eq.s32.totalorder %s26, 0
      %p68 = por %p66, %p67
      %p69 = scmp.ne.s32.totalorder %s57, %s58
      %p70 = scmp.eq.s32.totalorder %s27, 1
      %p71 = por %p69, %p70
      %p73 = scmp.ne.s32.totalorder %s58, %s72
      %p74 = scmp.eq.s32.totalorder %s27, 0
      %p75 = por %p73, %p74
      %s76 = ssub.s32 %s21, %s28
      %p77 = scmp.eq.s32.totalorder %s76, 0
      %s79 = sadd.s32 %s78, 1
      %s80 = scalar_select %p77, %s78, %s79
      %p83 = pneg %p77
      %p84 = scmp.eq.s32.totalorder %s21, 1
      %p85 = por %p83, %p84
      %p86 = scmp.ne.s32.totalorder %s78, %s81
      %p87 = scmp.eq.s32.totalorder %s21, 0
      %p88 = por %p86, %p87
      %p89 = scmp.ne.s32.totalorder %s78, %s81
      %p90 = scmp.eq.s32.totalorder %s26, 1
      %p91 = por %p89, %p90
      %p92 = scmp.ne.s32.totalorder %s81, %s82
      %p93 = scmp.eq.s32.totalorder %s26, 0
      %p94 = por %p92, %p93
      %p95 = scmp.ne.s32.totalorder %s81, %s82
      %p96 = scmp.eq.s32.totalorder %s27, 1
      %p97 = por %p95, %p96
      %p99 = scmp.ne.s32.totalorder %s82, %s98
      %p100 = scmp.eq.s32.totalorder %s27, 0
      %p101 = por %p99, %p100
      %s102 = ssub.s32 %s21, %s28
      %p103 = scmp.eq.s32.totalorder %s102, 0
      %s105 = sadd.s32 %s104, 1
      %s106 = scalar_select %p103, %s104, %s105
      %p109 = pneg %p103
      %p110 = scmp.eq.s32.totalorder %s21, 1
      %p111 = por %p109, %p110
      %p112 = scmp.ne.s32.totalorder %s104, %s107
      %p113 = scmp.eq.s32.totalorder %s21, 0
      %p114 = por %p112, %p113
      %p115 = scmp.ne.s32.totalorder %s104, %s107
      %p116 = scmp.eq.s32.totalorder %s26, 1
      %p117 = por %p115, %p116
      %p118 = scmp.ne.s32.totalorder %s107, %s108
      %p119 = scmp.eq.s32.totalorder %s26, 0
      %p120 = por %p118, %p119
      %p121 = scmp.ne.s32.totalorder %s107, %s108
      %p122 = scmp.eq.s32.totalorder %s27, 1
      %p123 = por %p121, %p122
      %p125 = scmp.ne.s32.totalorder %s108, %s124
      %p126 = scmp.eq.s32.totalorder %s27, 0
      %p127 = por %p125, %p126
      %s128 = ssub.s32 %s21, %s28
      %p129 = scmp.eq.s32.totalorder %s128, 0
      %s131 = sadd.s32 %s130, 1
      %s132 = scalar_select %p129, %s130, %s131
      %p135 = pneg %p129
      %p136 = scmp.eq.s32.totalorder %s21, 1
      %p137 = por %p135, %p136
      %p138 = scmp.ne.s32.totalorder %s130, %s133
      %p139 = scmp.eq.s32.totalorder %s21, 0
      %p140 = por %p138, %p139
      %p141 = scmp.ne.s32.totalorder %s130, %s133
      %p142 = scmp.eq.s32.totalorder %s26, 1
      %p143 = por %p141, %p142
      %p144 = scmp.ne.s32.totalorder %s133, %s134
      %p145 = scmp.eq.s32.totalorder %s26, 0
      %p146 = por %p144, %p145
      %p147 = scmp.ne.s32.totalorder %s133, %s134
      %p148 = scmp.eq.s32.totalorder %s27, 1
      %p149 = por %p147, %p148
      %p151 = scmp.ne.s32.totalorder %s134, %s150
      %p152 = scmp.eq.s32.totalorder %s27, 0
      %p153 = por %p151, %p152
      %p154 = scmp.le.s32.totalorder 1, %s21
      %p155 = scmp.lt.s32.totalorder %s21, 3
      %p156 = pnand %p154, %p155
      %p157 = pneg %p156
      // Predicated region
      $region9: #{tpu_custom_call.1} parent=5 // pred_check
        _
      $region10: #{tpu_custom_call.1} parent=5 // pred_check_branch
        %159 = sbr.rel (%p156) target = $region12
      $region11: #{tpu_custom_call.1} parent=5 // pred_region
        %s160 = ssub.s32 %s21, 1
        // Predicated region
        $region13: #{tpu_custom_call.1} parent=11 // pred_check
          %p161 = pneg %p68
        $region14: #{tpu_custom_call.1} parent=11 // pred_check_branch
          %163 = sbr.rel (%p161) target = $region16
        $region15: #{tpu_custom_call.1} parent=11 // pred_region
          %s165 = ssub.s32 2048, 2048
          %166 = vsyncadd [#allocation6], %s165
          %s167 = sshll.u32 [#allocation5], 4
          %s168 = int_to_ptr.vmem [resolvable:$true] %s167
          %173 = dma.hbm_to_vmem [thread:$0]  %s1, 2048, %s168, [#allocation6], 128, 128, 8
        $region16: #{tpu_custom_call.1} parent=11 // pred_fallthru
          _
      $region12: #{tpu_custom_call.1} parent=5 // pred_fallthru
        _
      %p174 = scmp.lt.s32.totalorder %s21, 2
      // Predicated region
      $region17: #{tpu_custom_call.1} parent=5 // pred_check
        %p175 = pneg %p174
      $region18: #{tpu_custom_call.1} parent=5 // pred_check_branch
        %177 = sbr.rel (%p175) target = $region20
      $region19: #{tpu_custom_call.1} parent=5 // pred_region
        // Predicated region
        $region21: #{tpu_custom_call.1} parent=19 // pred_check
          %p178 = pneg %p41
        $region22: #{tpu_custom_call.1} parent=19 // pred_check_branch
          %180 = sbr.rel (%p178) target = $region24
        $region23: #{tpu_custom_call.1} parent=19 // pred_region
          %s181 = sand.u32 %s31, 1
          %s182 = scalar_lea.sflag [#allocation3], %s181
          %s183 = sand.u32 %s31, 1
          %s184 = smul.addr %s183, 256
          %s185 = scalar_lea.vmem [#allocation2], %s184
          %s186 = smul.u32 32, %s21
          %s188 = ssub.s32 4096, 4096
          %189 = vsyncadd %s182, %s188
          %s190 = smul.addr %s186, 128
          %s191 = scalar_lea.hbm %s0, %s190
          %s192 = sshll.u32 %s185, 4
          %s193 = int_to_ptr.vmem [resolvable:$true] %s192
          %198 = dma.hbm_to_vmem [thread:$0]  %s191, 4096, %s193, %s182, 128, 128, 8
        $region24: #{tpu_custom_call.1} parent=19 // pred_fallthru
          _
      $region20: #{tpu_custom_call.1} parent=5 // pred_fallthru
        _
      %p199 = scmp.le.s32.totalorder 1, %s21
      %p200 = scmp.lt.s32.totalorder %s21, 3
      %p201 = pnand %p199, %p200
      %p202 = pneg %p201
      // Predicated region
      $region25: #{tpu_custom_call.1} parent=5 // pred_check
        _
      $region26: #{tpu_custom_call.1} parent=5 // pred_check_branch
        %204 = sbr.rel (%p201) target = $region28
      $region27: #{tpu_custom_call.1} parent=5 // pred_region
        %s205 = ssub.s32 %s21, 1
        %s206 = sand.u32 %s34, 1
        %s207 = scalar_lea.sflag [#allocation3], %s206
        %s208 = sand.u32 %s34, 1
        %s209 = smul.addr %s208, 256
        %s210 = scalar_lea.vmem [#allocation2], %s209
        // Predicated region
        $region29: #{tpu_custom_call.1} parent=27 // pred_check
          %p211 = pneg %p47
        $region30: #{tpu_custom_call.1} parent=27 // pred_check_branch
          %213 = sbr.rel (%p211) target = $region32
        $region31: #{tpu_custom_call.1} parent=27 // pred_region
          %214 = dma.done %s207, 4096
        $region32: #{tpu_custom_call.1} parent=27 // pred_fallthru
          _
        // Predicated region
        $region33: #{tpu_custom_call.1} parent=27 // pred_check
          %p215 = pneg %p68
        $region34: #{tpu_custom_call.1} parent=27 // pred_check_branch
          %217 = sbr.rel (%p215) target = $region36
        $region35: #{tpu_custom_call.1} parent=27 // pred_region
          %218 = dma.done [#allocation6], 2048
        $region36: #{tpu_custom_call.1} parent=27 // pred_fallthru
          _
        %s219 = sand.u32 %s34, 1
        %s220 = scalar_lea.sflag [#allocation3], %s219
        %s221 = sand.u32 %s34, 1
        %s222 = smul.addr %s221, 256
        %s223 = scalar_lea.vmem [#allocation2], %s222
        %p224 = pneg %p47
        %p225 = pneg %p44
        %p226 = pneg %p68
        %p227 = pneg %p65
        %p228 = pneg %p94
        %p229 = pneg %p91
        %s230 = sand.u32 %s81, 1
        %s231 = scalar_lea.sflag [#allocation4], %s230
        %s232 = sand.u32 %s81, 1
        %s233 = smul.addr %s232, 256
        %s234 = scalar_lea.vmem [#allocation7], %s233
        %p235 = pneg %p120
        %p236 = pneg %p117
        %s237 = sand.u32 %s26, 1
        %s238 = scalar_lea.sflag [#allocation9], %s237
        %s239 = sand.u32 %s107, 1
        %s240 = smul.addr %s239, 8
        %s241 = scalar_lea.vmem [#allocation8], %s240
        %p242 = pneg %p146
        %p243 = pneg %p143
        %s244 = sand.u32 %s26, 1
        %s245 = scalar_lea.sflag [#allocation9], %s244
        %s246 = sand.u32 %s133, 1
        %s247 = smul.addr %s246, 8
        %s248 = scalar_lea.vmem [#allocation10], %s247
        %s249 = smul.u32 32, %s26
        %s250 = smul.u32 32, %s26
        %v251 = vld [vmem:[%s210] sm:$0xff]
        %v252 = vld [vmem:[%s210 + $0x8] sm:$0xff]
        %v253 = vld [vmem:[%s210 + $0x10] sm:$0xff]
        %v254 = vld [vmem:[%s210 + $0x18] sm:$0xff]
        %v255 = vld [vmem:[%s210 + $0x20] sm:$0xff]
        %v256 = vld [vmem:[%s210 + $0x28] sm:$0xff]
        %v257 = vld [vmem:[%s210 + $0x30] sm:$0xff]
        %v258 = vld [vmem:[%s210 + $0x38] sm:$0xff]
        %v259 = vld [vmem:[%s210 + $0x40] sm:$0xff]
        %v260 = vld [vmem:[%s210 + $0x48] sm:$0xff]
        %v261 = vld [vmem:[%s210 + $0x50] sm:$0xff]
        %v262 = vld [vmem:[%s210 + $0x58] sm:$0xff]
        %v263 = vld [vmem:[%s210 + $0x60] sm:$0xff]
        %v264 = vld [vmem:[%s210 + $0x68] sm:$0xff]
        %v265 = vld [vmem:[%s210 + $0x70] sm:$0xff]
        %v266 = vld [vmem:[%s210 + $0x78] sm:$0xff]
        %v267 = vld [vmem:[%s210 + $0x80] sm:$0xff]
        %v268 = vld [vmem:[%s210 + $0x88] sm:$0xff]
        %v269 = vld [vmem:[%s210 + $0x90] sm:$0xff]
        %v270 = vld [vmem:[%s210 + $0x98] sm:$0xff]
        %v271 = vld [vmem:[%s210 + $0xa0] sm:$0xff]
        %v272 = vld [vmem:[%s210 + $0xa8] sm:$0xff]
        %v273 = vld [vmem:[%s210 + $0xb0] sm:$0xff]
        %v274 = vld [vmem:[%s210 + $0xb8] sm:$0xff]
        %v275 = vld [vmem:[%s210 + $0xc0] sm:$0xff]
        %v276 = vld [vmem:[%s210 + $0xc8] sm:$0xff]
        %v277 = vld [vmem:[%s210 + $0xd0] sm:$0xff]
        %v278 = vld [vmem:[%s210 + $0xd8] sm:$0xff]
        %v279 = vld [vmem:[%s210 + $0xe0] sm:$0xff]
        %v280 = vld [vmem:[%s210 + $0xe8] sm:$0xff]
        %v281 = vld [vmem:[%s210 + $0xf0] sm:$0xff]
        %v282 = vld [vmem:[%s210 + $0xf8] sm:$0xff]
        %v283 = vld [vmem:[#allocation5] sm:$0xff]
        %v284 = vld [vmem:[#allocation5 + $0x8] sm:$0xff]
        %v285 = vld [vmem:[#allocation5 + $0x10] sm:$0xff]
        %v286 = vld [vmem:[#allocation5 + $0x18] sm:$0xff]
        %v287 = vld [vmem:[#allocation5 + $0x20] sm:$0xff]
        %v288 = vld [vmem:[#allocation5 + $0x28] sm:$0xff]
        %v289 = vld [vmem:[#allocation5 + $0x30] sm:$0xff]
        %v290 = vld [vmem:[#allocation5 + $0x38] sm:$0xff]
        %v291 = vld [vmem:[#allocation5 + $0x40] sm:$0xff]
        %v292 = vld [vmem:[#allocation5 + $0x48] sm:$0xff]
        %v293 = vld [vmem:[#allocation5 + $0x50] sm:$0xff]
        %v294 = vld [vmem:[#allocation5 + $0x58] sm:$0xff]
        %v295 = vld [vmem:[#allocation5 + $0x60] sm:$0xff]
        %v296 = vld [vmem:[#allocation5 + $0x68] sm:$0xff]
        %v297 = vld [vmem:[#allocation5 + $0x70] sm:$0xff]
        %v298 = vld [vmem:[#allocation5 + $0x78] sm:$0xff]
        %299 = vmatprep.subr.mxu0 0.0
        %300 = vmatpush1.msra.mxu0 %v298
        %301 = vmatprep.subr.mxu0 0.0
        %302 = vmatpush1.msra.mxu0 %v297
        %303 = vmatprep.subr.mxu0 0.0
        %304 = vmatpush1.msra.mxu0 %v296
        %305 = vmatprep.subr.mxu0 0.0
        %306 = vmatpush1.msra.mxu0 %v295
        %307 = vmatprep.subr.mxu0 0.0
        %308 = vmatpush1.msra.mxu0 %v294
        %309 = vmatprep.subr.mxu0 0.0
        %310 = vmatpush1.msra.mxu0 %v293
        %311 = vmatprep.subr.mxu0 0.0
        %312 = vmatpush1.msra.mxu0 %v292
        %313 = vmatprep.subr.mxu0 0.0
        %314 = vmatpush1.msra.mxu0 %v291
        %315 = vmatprep.subr.mxu0 0.0
        %316 = vmatpush1.msra.mxu0 %v290
        %317 = vmatprep.subr.mxu0 0.0
        %318 = vmatpush1.msra.mxu0 %v289
        %319 = vmatprep.subr.mxu0 0.0
        %320 = vmatpush1.msra.mxu0 %v288
        %321 = vmatprep.subr.mxu0 0.0
        %322 = vmatpush1.msra.mxu0 %v287
        %323 = vmatprep.subr.mxu0 0.0
        %324 = vmatpush1.msra.mxu0 %v286
        %325 = vmatprep.subr.mxu0 0.0
        %326 = vmatpush1.msra.mxu0 %v285
        %327 = vmatprep.subr.mxu0 0.0
        %328 = vmatpush1.msra.mxu0 %v284
        %329 = vmatprep.subr.mxu0 0.0
        %330 = vmatpush1.msra.mxu0 %v283
        %331 = vmatprep.subr.mxu0 0.0
        %332 = vmatpush2.msra.mxu0 0.0
        %333 = vmatprep.subr.mxu0 0.0
        %334 = vmatpush2.msra.mxu0 0.0
        %335 = vmatprep.subr.mxu0 0.0
        %336 = vmatpush2.msra.mxu0 0.0
        %337 = vmatprep.subr.mxu0 0.0
        %338 = vmatpush2.msra.mxu0 0.0
        %339 = vmatprep.subr.mxu0 0.0
        %340 = vmatpush2.msra.mxu0 0.0
        %341 = vmatprep.subr.mxu0 0.0
        %342 = vmatpush2.msra.mxu0 0.0
        %343 = vmatprep.subr.mxu0 0.0
        %344 = vmatpush2.msra.mxu0 0.0
        %345 = vmatprep.subr.mxu0 0.0
        %346 = vmatpush2.msra.mxu0 0.0
        %347 = vmatprep.subr.mxu0 0.0
        %348 = vmatpush2.msra.mxu0 0.0
        %349 = vmatprep.subr.mxu0 0.0
        %350 = vmatpush2.msra.mxu0 0.0
        %351 = vmatprep.subr.mxu0 0.0
        %352 = vmatpush2.msra.mxu0 0.0
        %353 = vmatprep.subr.mxu0 0.0
        %354 = vmatpush2.msra.mxu0 0.0
        %355 = vmatprep.subr.mxu0 0.0
        %356 = vmatpush2.msra.mxu0 0.0
        %357 = vmatprep.subr.mxu0 0.0
        %358 = vmatpush2.msra.mxu0 0.0
        %359 = vmatprep.subr.mxu0 0.0
        %360 = vmatpush2.msra.mxu0 0.0
        %361 = vmatprep.subr.mxu0 0.0
        %362 = vmatpush2.msra.mxu0 0.0
        %363 = vmatprep.mubr.f32.mxu0 0.0
        %364 = vmatmul.mubr.f32.gmra.mxu0 %v251
        %v365 = vpop.f32.mrf.mxu0
        %v366 = vadd.f32 0.0, %v365
        %v367 = vpop.f32.mrf.mxu0
        %368 = vmatprep.mubr.f32.mxu0 0.0
        %369 = vmatmul.mubr.f32.gmra.mxu0 %v252
        %v370 = vpop.f32.mrf.mxu0
        %v371 = vadd.f32 0.0, %v370
        %v372 = vpop.f32.mrf.mxu0
        %373 = vmatprep.mubr.f32.mxu0 0.0
        %374 = vmatmul.mubr.f32.gmra.mxu0 %v253
        %v375 = vpop.f32.mrf.mxu0
        %v376 = vadd.f32 0.0, %v375
        %v377 = vpop.f32.mrf.mxu0
        %378 = vmatprep.mubr.f32.mxu0 0.0
        %379 = vmatmul.mubr.f32.gmra.mxu0 %v254
        %v380 = vpop.f32.mrf.mxu0
        %v381 = vadd.f32 0.0, %v380
        %v382 = vpop.f32.mrf.mxu0
        %383 = vmatprep.mubr.f32.mxu0 0.0
        %384 = vmatmul.mubr.f32.gmra.mxu0 %v255
        %v385 = vpop.f32.mrf.mxu0
        %v386 = vadd.f32 0.0, %v385
        %v387 = vpop.f32.mrf.mxu0
        %388 = vmatprep.mubr.f32.mxu0 0.0
        %389 = vmatmul.mubr.f32.gmra.mxu0 %v256
        %v390 = vpop.f32.mrf.mxu0
        %v391 = vadd.f32 0.0, %v390
        %v392 = vpop.f32.mrf.mxu0
        %393 = vmatprep.mubr.f32.mxu0 0.0
        %394 = vmatmul.mubr.f32.gmra.mxu0 %v257
        %v395 = vpop.f32.mrf.mxu0
        %v396 = vadd.f32 0.0, %v395
        %v397 = vpop.f32.mrf.mxu0
        %398 = vmatprep.mubr.f32.mxu0 0.0
        %399 = vmatmul.mubr.f32.gmra.mxu0 %v258
        %v400 = vpop.f32.mrf.mxu0
        %v401 = vadd.f32 0.0, %v400
        %v402 = vpop.f32.mrf.mxu0
        %403 = vmatprep.mubr.f32.mxu0 0.0
        %404 = vmatmul.mubr.f32.gmra.mxu0 %v259
        %v405 = vpop.f32.mrf.mxu0
        %v406 = vadd.f32 0.0, %v405
        %v407 = vpop.f32.mrf.mxu0
        %408 = vmatprep.mubr.f32.mxu0 0.0
        %409 = vmatmul.mubr.f32.gmra.mxu0 %v260
        %v410 = vpop.f32.mrf.mxu0
        %v411 = vadd.f32 0.0, %v410
        %v412 = vpop.f32.mrf.mxu0
        %413 = vmatprep.mubr.f32.mxu0 0.0
        %414 = vmatmul.mubr.f32.gmra.mxu0 %v261
        %v415 = vpop.f32.mrf.mxu0
        %v416 = vadd.f32 0.0, %v415
        %v417 = vpop.f32.mrf.mxu0
        %418 = vmatprep.mubr.f32.mxu0 0.0
        %419 = vmatmul.mubr.f32.gmra.mxu0 %v262
        %v420 = vpop.f32.mrf.mxu0
        %v421 = vadd.f32 0.0, %v420
        %v422 = vpop.f32.mrf.mxu0
        %423 = vmatprep.mubr.f32.mxu0 0.0
        %424 = vmatmul.mubr.f32.gmra.mxu0 %v263
        %v425 = vpop.f32.mrf.mxu0
        %v426 = vadd.f32 0.0, %v425
        %v427 = vpop.f32.mrf.mxu0
        %428 = vmatprep.mubr.f32.mxu0 0.0
        %429 = vmatmul.mubr.f32.gmra.mxu0 %v264
        %v430 = vpop.f32.mrf.mxu0
        %v431 = vadd.f32 0.0, %v430
        %v432 = vpop.f32.mrf.mxu0
        %433 = vmatprep.mubr.f32.mxu0 0.0
        %434 = vmatmul.mubr.f32.gmra.mxu0 %v265
        %v435 = vpop.f32.mrf.mxu0
        %v436 = vadd.f32 0.0, %v435
        %v437 = vpop.f32.mrf.mxu0
        %438 = vmatprep.mubr.f32.mxu0 0.0
        %439 = vmatmul.mubr.f32.gmra.mxu0 %v266
        %v440 = vpop.f32.mrf.mxu0
        %v441 = vadd.f32 0.0, %v440
        %v442 = vpop.f32.mrf.mxu0
        %443 = vmatprep.mubr.f32.mxu0 0.0
        %444 = vmatmul.mubr.f32.gmra.mxu0 %v267
        %v445 = vpop.f32.mrf.mxu0
        %v446 = vadd.f32 0.0, %v445
        %v447 = vpop.f32.mrf.mxu0
        %448 = vmatprep.mubr.f32.mxu0 0.0
        %449 = vmatmul.mubr.f32.gmra.mxu0 %v268
        %v450 = vpop.f32.mrf.mxu0
        %v451 = vadd.f32 0.0, %v450
        %v452 = vpop.f32.mrf.mxu0
        %453 = vmatprep.mubr.f32.mxu0 0.0
        %454 = vmatmul.mubr.f32.gmra.mxu0 %v269
        %v455 = vpop.f32.mrf.mxu0
        %v456 = vadd.f32 0.0, %v455
        %v457 = vpop.f32.mrf.mxu0
        %458 = vmatprep.mubr.f32.mxu0 0.0
        %459 = vmatmul.mubr.f32.gmra.mxu0 %v270
        %v460 = vpop.f32.mrf.mxu0
        %v461 = vadd.f32 0.0, %v460
        %v462 = vpop.f32.mrf.mxu0
        %463 = vmatprep.mubr.f32.mxu0 0.0
        %464 = vmatmul.mubr.f32.gmra.mxu0 %v271
        %v465 = vpop.f32.mrf.mxu0
        %v466 = vadd.f32 0.0, %v465
        %v467 = vpop.f32.mrf.mxu0
        %468 = vmatprep.mubr.f32.mxu0 0.0
        %469 = vmatmul.mubr.f32.gmra.mxu0 %v272
        %v470 = vpop.f32.mrf.mxu0
        %v471 = vadd.f32 0.0, %v470
        %v472 = vpop.f32.mrf.mxu0
        %473 = vmatprep.mubr.f32.mxu0 0.0
        %474 = vmatmul.mubr.f32.gmra.mxu0 %v273
        %v475 = vpop.f32.mrf.mxu0
        %v476 = vadd.f32 0.0, %v475
        %v477 = vpop.f32.mrf.mxu0
        %478 = vmatprep.mubr.f32.mxu0 0.0
        %479 = vmatmul.mubr.f32.gmra.mxu0 %v274
        %v480 = vpop.f32.mrf.mxu0
        %v481 = vadd.f32 0.0, %v480
        %v482 = vpop.f32.mrf.mxu0
        %483 = vmatprep.mubr.f32.mxu0 0.0
        %484 = vmatmul.mubr.f32.gmra.mxu0 %v275
        %v485 = vpop.f32.mrf.mxu0
        %v486 = vadd.f32 0.0, %v485
        %v487 = vpop.f32.mrf.mxu0
        %488 = vmatprep.mubr.f32.mxu0 0.0
        %489 = vmatmul.mubr.f32.gmra.mxu0 %v276
        %v490 = vpop.f32.mrf.mxu0
        %v491 = vadd.f32 0.0, %v490
        %v492 = vpop.f32.mrf.mxu0
        %493 = vmatprep.mubr.f32.mxu0 0.0
        %494 = vmatmul.mubr.f32.gmra.mxu0 %v277
        %v495 = vpop.f32.mrf.mxu0
        %v496 = vadd.f32 0.0, %v495
        %v497 = vpop.f32.mrf.mxu0
        %498 = vmatprep.mubr.f32.mxu0 0.0
        %499 = vmatmul.mubr.f32.gmra.mxu0 %v278
        %v500 = vpop.f32.mrf.mxu0
        %v501 = vadd.f32 0.0, %v500
        %v502 = vpop.f32.mrf.mxu0
        %503 = vmatprep.mubr.f32.mxu0 0.0
        %504 = vmatmul.mubr.f32.gmra.mxu0 %v279
        %v505 = vpop.f32.mrf.mxu0
        %v506 = vadd.f32 0.0, %v505
        %v507 = vpop.f32.mrf.mxu0
        %508 = vmatprep.mubr.f32.mxu0 0.0
        %509 = vmatmul.mubr.f32.gmra.mxu0 %v280
        %v510 = vpop.f32.mrf.mxu0
        %v511 = vadd.f32 0.0, %v510
        %v512 = vpop.f32.mrf.mxu0
        %513 = vmatprep.mubr.f32.mxu0 0.0
        %514 = vmatmul.mubr.f32.gmra.mxu0 %v281
        %v515 = vpop.f32.mrf.mxu0
        %v516 = vadd.f32 0.0, %v515
        %v517 = vpop.f32.mrf.mxu0
        %518 = vmatprep.mubr.f32.mxu0 0.0
        %519 = vmatmul.mubr.f32.gmra.mxu0 %v282
        %v520 = vpop.f32.mrf.mxu0
        %v521 = vadd.f32 0.0, %v520
        %v522 = vpop.f32.mrf.mxu0
        %523 = vdwg.mxu0
        %524 = vst [vmem:[%s234] sm:$0xff] %v366
        %525 = vst [vmem:[%s234 + $0x8] sm:$0xff] %v371
        %526 = vst [vmem:[%s234 + $0x10] sm:$0xff] %v376
        %527 = vst [vmem:[%s234 + $0x18] sm:$0xff] %v381
        %528 = vst [vmem:[%s234 + $0x20] sm:$0xff] %v386
        %529 = vst [vmem:[%s234 + $0x28] sm:$0xff] %v391
        %530 = vst [vmem:[%s234 + $0x30] sm:$0xff] %v396
        %531 = vst [vmem:[%s234 + $0x38] sm:$0xff] %v401
        %532 = vst [vmem:[%s234 + $0x40] sm:$0xff] %v406
        %533 = vst [vmem:[%s234 + $0x48] sm:$0xff] %v411
        %534 = vst [vmem:[%s234 + $0x50] sm:$0xff] %v416
        %535 = vst [vmem:[%s234 + $0x58] sm:$0xff] %v421
        %536 = vst [vmem:[%s234 + $0x60] sm:$0xff] %v426
        %537 = vst [vmem:[%s234 + $0x68] sm:$0xff] %v431
        %538 = vst [vmem:[%s234 + $0x70] sm:$0xff] %v436
        %539 = vst [vmem:[%s234 + $0x78] sm:$0xff] %v441
        %540 = vst [vmem:[%s234 + $0x80] sm:$0xff] %v446
        %541 = vst [vmem:[%s234 + $0x88] sm:$0xff] %v451
        %542 = vst [vmem:[%s234 + $0x90] sm:$0xff] %v456
        %543 = vst [vmem:[%s234 + $0x98] sm:$0xff] %v461
        %544 = vst [vmem:[%s234 + $0xa0] sm:$0xff] %v466
        %545 = vst [vmem:[%s234 + $0xa8] sm:$0xff] %v471
        %546 = vst [vmem:[%s234 + $0xb0] sm:$0xff] %v476
        %547 = vst [vmem:[%s234 + $0xb8] sm:$0xff] %v481
        %548 = vst [vmem:[%s234 + $0xc0] sm:$0xff] %v486
        %549 = vst [vmem:[%s234 + $0xc8] sm:$0xff] %v491
        %550 = vst [vmem:[%s234 + $0xd0] sm:$0xff] %v496
        %551 = vst [vmem:[%s234 + $0xd8] sm:$0xff] %v501
        %552 = vst [vmem:[%s234 + $0xe0] sm:$0xff] %v506
        %553 = vst [vmem:[%s234 + $0xe8] sm:$0xff] %v511
        %554 = vst [vmem:[%s234 + $0xf0] sm:$0xff] %v516
        %555 = vst [vmem:[%s234 + $0xf8] sm:$0xff] %v521
        %v556 = vadd.f32 %v366, %v371
        %v557 = vadd.f32 %v556, %v376
        %v558 = vadd.f32 %v557, %v381
        %v559 = vadd.f32 %v558, %v386
        %v560 = vadd.f32 %v559, %v391
        %v561 = vadd.f32 %v560, %v396
        %v562 = vadd.f32 %v561, %v401
        %v563 = vadd.f32 %v562, %v406
        %v564 = vadd.f32 %v563, %v411
        %v565 = vadd.f32 %v564, %v416
        %v566 = vadd.f32 %v565, %v421
        %v567 = vadd.f32 %v566, %v426
        %v568 = vadd.f32 %v567, %v431
        %v569 = vadd.f32 %v568, %v436
        %v570 = vadd.f32 %v569, %v441
        %v571 = vadd.f32 %v570, %v446
        %v572 = vadd.f32 %v571, %v451
        %v573 = vadd.f32 %v572, %v456
        %v574 = vadd.f32 %v573, %v461
        %v575 = vadd.f32 %v574, %v466
        %v576 = vadd.f32 %v575, %v471
        %v577 = vadd.f32 %v576, %v476
        %v578 = vadd.f32 %v577, %v481
        %v579 = vadd.f32 %v578, %v486
        %v580 = vadd.f32 %v579, %v491
        %v581 = vadd.f32 %v580, %v496
        %v582 = vadd.f32 %v581, %v501
        %v583 = vadd.f32 %v582, %v506
        %v584 = vadd.f32 %v583, %v511
        %v585 = vadd.f32 %v584, %v516
        %v586 = vadd.f32 %v585, %v521
        %v587 = vrot.slane %v586, 4
        %v588 = vadd.f32 %v586, %v587
        %v589 = vrot.slane %v588, 2
        %v590 = vadd.f32 %v588, %v589
        %v591 = vrot.slane %v590, 1
        %v592 = vadd.f32 %v590, %v591
        %v593 = vmul.f32 %v366, %v366
        %v594 = vmul.f32 %v371, %v371
        %v595 = vmul.f32 %v376, %v376
        %v596 = vmul.f32 %v381, %v381
        %v597 = vmul.f32 %v386, %v386
        %v598 = vmul.f32 %v391, %v391
        %v599 = vmul.f32 %v396, %v396
        %v600 = vmul.f32 %v401, %v401
        %v601 = vmul.f32 %v406, %v406
        %v602 = vmul.f32 %v411, %v411
        %v603 = vmul.f32 %v416, %v416
        %v604 = vmul.f32 %v421, %v421
        %v605 = vmul.f32 %v426, %v426
        %v606 = vmul.f32 %v431, %v431
        %v607 = vmul.f32 %v436, %v436
        %v608 = vmul.f32 %v441, %v441
        %v609 = vmul.f32 %v446, %v446
        %v610 = vmul.f32 %v451, %v451
        %v611 = vmul.f32 %v456, %v456
        %v612 = vmul.f32 %v461, %v461
        %v613 = vmul.f32 %v466, %v466
        %v614 = vmul.f32 %v471, %v471
        %v615 = vmul.f32 %v476, %v476
        %v616 = vmul.f32 %v481, %v481
        %v617 = vmul.f32 %v486, %v486
        %v618 = vmul.f32 %v491, %v491
        %v619 = vmul.f32 %v496, %v496
        %v620 = vmul.f32 %v501, %v501
        %v621 = vmul.f32 %v506, %v506
        %v622 = vmul.f32 %v511, %v511
        %v623 = vmul.f32 %v516, %v516
        %v624 = vmul.f32 %v521, %v521
        %v625 = vadd.f32 %v593, %v594
        %v626 = vadd.f32 %v625, %v595
        %v627 = vadd.f32 %v626, %v596
        %v628 = vadd.f32 %v627, %v597
        %v629 = vadd.f32 %v628, %v598
        %v630 = vadd.f32 %v629, %v599
        %v631 = vadd.f32 %v630, %v600
        %v632 = vadd.f32 %v631, %v601
        %v633 = vadd.f32 %v632, %v602
        %v634 = vadd.f32 %v633, %v603
        %v635 = vadd.f32 %v634, %v604
        %v636 = vadd.f32 %v635, %v605
        %v637 = vadd.f32 %v636, %v606
        %v638 = vadd.f32 %v637, %v607
        %v639 = vadd.f32 %v638, %v608
        %v640 = vadd.f32 %v639, %v609
        %v641 = vadd.f32 %v640, %v610
        %v642 = vadd.f32 %v641, %v611
        %v643 = vadd.f32 %v642, %v612
        %v644 = vadd.f32 %v643, %v613
        %v645 = vadd.f32 %v644, %v614
        %v646 = vadd.f32 %v645, %v615
        %v647 = vadd.f32 %v646, %v616
        %v648 = vadd.f32 %v647, %v617
        %v649 = vadd.f32 %v648, %v618
        %v650 = vadd.f32 %v649, %v619
        %v651 = vadd.f32 %v650, %v620
        %v652 = vadd.f32 %v651, %v621
        %v653 = vadd.f32 %v652, %v622
        %v654 = vadd.f32 %v653, %v623
        %v655 = vadd.f32 %v654, %v624
        %v656 = vrot.slane %v655, 4
        %v657 = vadd.f32 %v655, %v656
        %v658 = vrot.slane %v657, 2
        %v659 = vadd.f32 %v657, %v658
        %v660 = vrot.slane %v659, 1
        %v661 = vadd.f32 %v659, %v660
        %662 = vst [vmem:[%s241] sm:$0xff] %v592
        %663 = vst [vmem:[%s248] sm:$0xff] %v661
        %s664 = sand.u32 %s81, 1
        %s665 = scalar_lea.sflag [#allocation4], %s664
        %s666 = sand.u32 %s81, 1
        %s667 = smul.addr %s666, 256
        %s668 = scalar_lea.vmem [#allocation7], %s667
        %s669 = sand.u32 %s26, 1
        %s670 = scalar_lea.sflag [#allocation9], %s669
        %s671 = sand.u32 %s107, 1
        %s672 = smul.addr %s671, 8
        %s673 = scalar_lea.vmem [#allocation8], %s672
        %s674 = sand.u32 %s26, 1
        %s675 = scalar_lea.sflag [#allocation9], %s674
        %s676 = sand.u32 %s133, 1
        %s677 = smul.addr %s676, 8
        %s678 = scalar_lea.vmem [#allocation10], %s677
        // Predicated region
        $region37: #{tpu_custom_call.1} parent=27 // pred_check
          %p679 = pneg %p91
        $region38: #{tpu_custom_call.1} parent=27 // pred_check_branch
          %681 = sbr.rel (%p679) target = $region40
        $region39: #{tpu_custom_call.1} parent=27 // pred_region
          %s682 = smul.u32 32, %s26
          %s684 = ssub.s32 4096, 4096
          %685 = vsyncadd %s665, %s684
          %s686 = smul.addr %s682, 128
          %s687 = scalar_lea.hbm %s2, %s686
          %s688 = sshll.u32 %s668, 4
          %s689 = int_to_ptr.vmem [resolvable:$true] %s688
          %694 = dma.vmem_to_hbm [thread:$0]  %s689, 4096, %s687, %s665, 128, 128, 8
        $region40: #{tpu_custom_call.1} parent=27 // pred_fallthru
          _
        // Predicated region
        $region41: #{tpu_custom_call.1} parent=27 // pred_check
          %p695 = pneg %p117
        $region42: #{tpu_custom_call.1} parent=27 // pred_check_branch
          %697 = sbr.rel (%p695) target = $region44
        $region43: #{tpu_custom_call.1} parent=27 // pred_region
          %s699 = ssub.s32 128, 128
          %700 = vsyncadd %s670, %s699
          %s701 = smul.addr %s26, 128
          %s702 = scalar_lea.hbm %s3, %s701
          %s704 = sshll.u32 %s673, 4
          %s705 = int_to_ptr.vmem [resolvable:$true] %s704
          %707 = dma.vmem_to_hbm [thread:$0]  %s705, 128, %s702, %s670
        $region44: #{tpu_custom_call.1} parent=27 // pred_fallthru
          _
        // Predicated region
        $region45: #{tpu_custom_call.1} parent=27 // pred_check
          %p708 = pneg %p143
        $region46: #{tpu_custom_call.1} parent=27 // pred_check_branch
          %710 = sbr.rel (%p708) target = $region48
        $region47: #{tpu_custom_call.1} parent=27 // pred_region
          %s712 = ssub.s32 128, 128
          %713 = vsyncadd %s675, %s712
          %s714 = smul.addr %s26, 128
          %s715 = scalar_lea.hbm %s4, %s714
          %s717 = sshll.u32 %s678, 4
          %s718 = int_to_ptr.vmem [resolvable:$true] %s717
          %720 = dma.vmem_to_hbm [thread:$0]  %s718, 128, %s715, %s675
        $region48: #{tpu_custom_call.1} parent=27 // pred_fallthru
          _
      $region28: #{tpu_custom_call.1} parent=5 // pred_fallthru
        _
      %p721 = scmp.le.s32.totalorder 2, %s21
      // Predicated region
      $region49: #{tpu_custom_call.1} parent=5 // pred_check
        %p722 = pneg %p721
      $region50: #{tpu_custom_call.1} parent=5 // pred_check_branch
        %724 = sbr.rel (%p722) target = $region52
      $region51: #{tpu_custom_call.1} parent=5 // pred_region
        %s725 = ssub.s32 %s21, 2
        // Predicated region
        $region53: #{tpu_custom_call.1} parent=51 // pred_check
          %p726 = pneg %p97
        $region54: #{tpu_custom_call.1} parent=51 // pred_check_branch
          %728 = sbr.rel (%p726) target = $region56
        $region55: #{tpu_custom_call.1} parent=51 // pred_region
          %s729 = sand.u32 %s82, 1
          %s730 = scalar_lea.sflag [#allocation4], %s729
          %s731 = sand.u32 %s82, 1
          %s732 = smul.addr %s731, 256
          %s733 = scalar_lea.vmem [#allocation7], %s732
          %734 = dma.done %s730, 4096
        $region56: #{tpu_custom_call.1} parent=51 // pred_fallthru
          _
        // Predicated region
        $region57: #{tpu_custom_call.1} parent=51 // pred_check
          %p735 = pneg %p123
        $region58: #{tpu_custom_call.1} parent=51 // pred_check_branch
          %737 = sbr.rel (%p735) target = $region60
        $region59: #{tpu_custom_call.1} parent=51 // pred_region
          %s738 = sand.u32 %s27, 1
          %s739 = scalar_lea.sflag [#allocation9], %s738
          %s740 = sand.u32 %s108, 1
          %s741 = smul.addr %s740, 8
          %s742 = scalar_lea.vmem [#allocation8], %s741
          %743 = dma.done %s739, 128
        $region60: #{tpu_custom_call.1} parent=51 // pred_fallthru
          _
        // Predicated region
        $region61: #{tpu_custom_call.1} parent=51 // pred_check
          %p744 = pneg %p149
        $region62: #{tpu_custom_call.1} parent=51 // pred_check_branch
          %746 = sbr.rel (%p744) target = $region64
        $region63: #{tpu_custom_call.1} parent=51 // pred_region
          %s747 = sand.u32 %s27, 1
          %s748 = scalar_lea.sflag [#allocation9], %s747
          %s749 = sand.u32 %s134, 1
          %s750 = smul.addr %s749, 8
          %s751 = scalar_lea.vmem [#allocation10], %s750
          %752 = dma.done %s748, 128
        $region64: #{tpu_custom_call.1} parent=51 // pred_fallthru
          _
      $region52: #{tpu_custom_call.1} parent=5 // pred_fallthru
        _
    $region6: #{tpu_custom_call.1} parent=1 // loop_footer
      %s25 = sadd.s32 1, %s21
    $region7: #{tpu_custom_call.1} parent=1 // loop_footer_branch
      %20 = sbr.rel target = $region3
    $region8: #{tpu_custom_call.1} parent=1 // loop_exit
      _
    %753 = vsyncpa [#allocation3], 1
    %s754 = scalar_lea.sflag [#allocation3], 1
    %755 = vsyncpa %s754, 1
    %756 = vsyncpa [#allocation6], 1
    %757 = vsyncpa [#allocation4], 1
    %s758 = scalar_lea.sflag [#allocation4], 1
    %759 = vsyncpa %s758, 1
    %760 = vsyncpa [#allocation9], 1
    %s761 = scalar_lea.sflag [#allocation9], 1
    %762 = vsyncpa %s761, 1

</llo_original>
